<compile_context>
chip_gen: v7x
topology: tpu7x:2x2x1
jax: 0.10.0
libtpu: 0.0.40
codegen_flags: <defaults>
</compile_context>

<pallas_src>
import functools

import jax
import jax.numpy as jnp
from jax.experimental import pallas as pl
from jax.experimental.pallas import tpu as pltpu


_VMEM_LIMIT = 32 * 1024 * 1024       # fits v5e/v6e (128 MiB) and v7x (64 MiB/TC)
_FAST_PATH_MAX_ELEMS = 1 << 18       # <= 1 MiB per f32 operand -> fused single pass


def _round_up(x, m):
    return ((x + m - 1) // m) * m


# --------------------------------------------------------------------------- #
# Fast path: fused single-pass kernel, whole slab resident in VMEM.
# --------------------------------------------------------------------------- #
def _fused_kernel(t_ref, p_ref, out_ref, *, threshold):
    diff = jnp.abs(t_ref[...].astype(jnp.float32) - p_ref[...].astype(jnp.float32))
    delta = threshold * jnp.max(diff)                 # global max of |t - p|
    part1 = jnp.where(diff < delta, diff, 0.0)
    sq = diff * diff + delta * delta
    # NOTE: delta == 0 (target == pred everywhere) -> 0 * inf = NaN, matching
    # PyTorch's 0/0 NaN behavior.
    part2 = jnp.where(sq > 2.0 * delta * delta, sq, 0.0) * (0.5 / delta)
    out_ref[...] = (part1 + part2).astype(out_ref.dtype)


# --------------------------------------------------------------------------- #
# Large path, pass 1: per-tile (8,128) partial maxima (megacore-parallel grid).
# --------------------------------------------------------------------------- #
def _partial_max_kernel(t_ref, p_ref, pmax_ref, *, total_rows):
    tile_rows, lanes = t_ref.shape
    diff = jnp.abs(t_ref[...].astype(jnp.float32) - p_ref[...].astype(jnp.float32))

    # The last grid block may overhang the array; OOB rows hold garbage, so
    # mask them to 0 (diff >= 0 makes 0 a valid identity for max).
    row0 = pl.program_id(0) * tile_rows
    row_ids = row0 + jax.lax.broadcasted_iota(jnp.int32, diff.shape, 0)
    diff = jnp.where(row_ids < total_rows, diff, 0.0)

    # VPU-only fold to one (8, 128) partial-max block (slices stay on (8,128)
    # vreg boundaries, so no relayout; the cross-lane reduce is deferred to the
    # tiny XLA epilogue).
    acc = diff[0:8, :]
    for g in range(1, tile_rows // 8):
        acc = jnp.maximum(acc, diff[g * 8:(g + 1) * 8, :])
    out = acc[:, 0:128]
    for b in range(1, lanes // 128):
        out = jnp.maximum(out, acc[:, b * 128:(b + 1) * 128])
    pmax_ref[...] = out


# --------------------------------------------------------------------------- #
# Large path, pass 2: tiled elementwise BerHu transform.
# --------------------------------------------------------------------------- #
def _berhu_kernel(s_ref, t_ref, p_ref, out_ref):
    """s_ref (SMEM) = [delta, 1/(2*delta), delta^2, 2*delta^2]."""
    delta = s_ref[0]
    inv_2delta = s_ref[1]
    delta_sq = s_ref[2]
    two_delta_sq = s_ref[3]

    diff = jnp.abs(t_ref[...].astype(jnp.float32) - p_ref[...].astype(jnp.float32))
    # part1 = -F.threshold(-diff, -delta, 0): diff where diff < delta else 0
    part1 = jnp.where(diff < delta, diff, 0.0)
    # part2 = F.threshold(diff^2 + delta^2, 2*delta^2, 0) * (1 / (2*delta))
    sq = diff * diff + delta_sq
    part2 = jnp.where(sq > two_delta_sq, sq, 0.0) * inv_2delta
    out_ref[...] = (part1 + part2).astype(out_ref.dtype)


@functools.partial(jax.jit, static_argnames=("threshold",))
def berhu_loss(target, pred, threshold=0.2):
    assert target.shape == pred.shape, "inconsistent dimensions"
    orig_shape = target.shape
    n = target.size
    threshold = float(threshold)

    # Lane-dense slab layout: wide last dim for large tensors, 128 minimum.
    lanes = 512 if n >= (1 << 19) else 128
    rows = pl.cdiv(n, lanes)
    n_slab = rows * lanes

    t_flat = target.reshape(-1)
    p_flat = pred.reshape(-1)
    if n_slab != n:
        # Only the ragged lane tail is padded (< `lanes` real padding elements);
        # partial *row* tiles are handled in-kernel, so there is no tile-size
        # inflation of HBM traffic any more.  Padded diff == 0 never affects the
        # global max, and padded outputs are sliced off below.
        # TODO(synk): this still copies the operands once for n % lanes != 0; a
        # fully pad-free path would need ragged 1-D blocks.
        t_flat = jnp.pad(t_flat, (0, n_slab - n))
        p_flat = jnp.pad(p_flat, (0, n_slab - n))
    t2d = t_flat.reshape(rows, lanes)
    p2d = p_flat.reshape(rows, lanes)

    if n_slab <= _FAST_PATH_MAX_ELEMS:
        # ---------------- Fused single pass (small tensors). ----------------
        out2d = pl.pallas_call(
            functools.partial(_fused_kernel, threshold=threshold),
            out_shape=jax.ShapeDtypeStruct((rows, lanes), target.dtype),
            compiler_params=pltpu.CompilerParams(vmem_limit_bytes=_VMEM_LIMIT),
        )(t2d, p2d)
    else:
        tile_rows = min(1024, _round_up(rows, 8))        # 2 MiB f32 blocks max
        num_tiles = pl.cdiv(rows, tile_rows)
        tile_spec = pl.BlockSpec((tile_rows, lanes), lambda i: (i, 0))

        # ---- Pass 1: partial maxima, parallel grid (shards across v7x TCs). ----
        partials = pl.pallas_call(
            functools.partial(_partial_max_kernel, total_rows=rows),
            out_shape=jax.ShapeDtypeStruct((num_tiles * 8, 128), jnp.float32),
            grid=(num_tiles,),
            in_specs=[tile_spec, tile_spec],
            out_specs=pl.BlockSpec((8, 128), lambda i: (i, 0)),
            compiler_params=pltpu.CompilerParams(
                dimension_semantics=("parallel",),
                vmem_limit_bytes=_VMEM_LIMIT),
        )(t2d, p2d)

        # Tiny epilogue: global max -> delta; hoist all scalar math (incl. the
        # divide) out of the pass-2 vector path.
        # NOTE: delta == 0 yields NaN (0.5/0 = inf, 0*inf), same as PyTorch.
        delta = threshold * jnp.max(partials)
        scalars = jnp.stack(
            [delta, 0.5 / delta, delta * delta, 2.0 * delta * delta]
        ).astype(jnp.float32)

        # ---------------- Pass 2: tiled elementwise transform. ----------------
        out2d = pl.pallas_call(
            _berhu_kernel,
            out_shape=jax.ShapeDtypeStruct((rows, lanes), target.dtype),
            grid=(num_tiles,),
            in_specs=[
                pl.BlockSpec(memory_space=pltpu.MemorySpace.SMEM),  # scalar params
                tile_spec,
                tile_spec,
            ],
            out_specs=tile_spec,
            compiler_params=pltpu.CompilerParams(
                dimension_semantics=("parallel",),
                vmem_limit_bytes=_VMEM_LIMIT),
        )(scalars, t2d, p2d)

    return out2d.reshape(-1)[:n].reshape(orig_shape)


def _reference_berhu(target, pred, threshold=0.2):
    # Pure-JAX reference of the PyTorch forward, for correctness checking.
    diff = jnp.abs(target - pred)
    delta = threshold * jnp.max(diff)
    part1 = jnp.where(diff < delta, diff, 0.0)
    sq = diff ** 2 + delta ** 2
    part2 = jnp.where(sq > 2.0 * delta ** 2, sq, 0.0) / (2.0 * delta)
    return part1 + part2


if __name__ == "__main__":
    key = jax.random.PRNGKey(0)
    k1, k2 = jax.random.split(key)

    # Small NCHW-shaped depth maps: batch=2, channels=4, spatial=16x16.
    shape = (2, 4, 16, 16)
    target = jax.random.uniform(k1, shape, dtype=jnp.float32)
    pred = jax.random.uniform(k2, shape, dtype=jnp.float32)

    out = berhu_loss(target, pred, threshold=0.2)
    out = jax.block_until_ready(out)

    ref = _reference_berhu(target, pred, threshold=0.2)
    assert out.shape == target.shape
    assert jnp.allclose(out, ref, atol=1e-5, rtol=1e-5)

    # Also exercise the tiled two-pass large path once (ragged row count).
    big_shape = (3, 3, 192, 200)   # 345600 elements -> two-pass path
    tb = jax.random.uniform(k1, big_shape, dtype=jnp.float32)
    pb = jax.random.uniform(k2, big_shape, dtype=jnp.float32)
    out_b = jax.block_until_ready(berhu_loss(tb, pb, threshold=0.2))
    ref_b = _reference_berhu(tb, pb, threshold=0.2)
    assert out_b.shape == big_shape
    assert jnp.allclose(out_b, ref_b, atol=1e-5, rtol=1e-5)

    print("KERNEL_OK")
</pallas_src>

<mosaic_0001>
module attributes {stable_mosaic.version = 11 : i64} {
  func.func @_fused_kernel(%arg0: memref<16x128xf32, #tpu.memory_space<vmem>>, %arg1: memref<16x128xf32, #tpu.memory_space<vmem>>, %arg2: memref<16x128xf32, #tpu.memory_space<vmem>>) attributes {dimension_semantics = [], scalar_prefetch = 0 : i64, scratch_operands = 0 : i64, tpu.core_type = #tpu.core_type<tc>} {
    %c0 = arith.constant 0 : index
    %c0_0 = arith.constant 0 : index
    %0 = vector.load %arg0[%c0, %c0_0] : memref<16x128xf32, #tpu.memory_space<vmem>>, vector<16x128xf32>
    %c0_1 = arith.constant 0 : index
    %c0_2 = arith.constant 0 : index
    %1 = vector.load %arg1[%c0_1, %c0_2] : memref<16x128xf32, #tpu.memory_space<vmem>>, vector<16x128xf32>
    %2 = arith.subf %0, %1 : vector<16x128xf32>
    %3 = math.absf %2 : vector<16x128xf32>
    %4 = vector.shape_cast %3 : vector<16x128xf32> to vector<1x16x128xf32>
    %cst = arith.constant dense<0xFF800000> : vector<1xf32>
    %5 = vector.multi_reduction <maximumf>, %4, %cst [1, 2] : vector<1x16x128xf32> to vector<1xf32>
    %6 = vector.shape_cast %5 : vector<1xf32> to vector<1x1x1xf32>
    %7 = vector.extract %6[0, 0, 0] : f32 from vector<1x1x1xf32>
    %cst_3 = arith.constant 2.000000e-01 : f32
    %8 = arith.mulf %cst_3, %7 : f32
    %9 = vector.broadcast %8 : f32 to vector<16x128xf32>
    %10 = arith.cmpf olt, %3, %9 : vector<16x128xf32>
    %cst_4 = arith.constant 0.000000e+00 : f32
    %11 = vector.broadcast %cst_4 : f32 to vector<16x128xf32>
    %12 = arith.select %10, %3, %11 : vector<16x128xi1>, vector<16x128xf32>
    %13 = arith.mulf %3, %3 : vector<16x128xf32>
    %14 = arith.mulf %8, %8 : f32
    %15 = vector.broadcast %14 : f32 to vector<16x128xf32>
    %16 = arith.addf %13, %15 : vector<16x128xf32>
    %cst_5 = arith.constant 2.000000e+00 : f32
    %17 = arith.mulf %cst_5, %8 : f32
    %18 = arith.mulf %17, %8 : f32
    %19 = vector.broadcast %18 : f32 to vector<16x128xf32>
    %20 = arith.cmpf ogt, %16, %19 : vector<16x128xf32>
    %cst_6 = arith.constant 0.000000e+00 : f32
    %21 = vector.broadcast %cst_6 : f32 to vector<16x128xf32>
    %22 = arith.select %20, %16, %21 : vector<16x128xi1>, vector<16x128xf32>
    %cst_7 = arith.constant 5.000000e-01 : f32
    %23 = arith.divf %cst_7, %8 : f32
    %24 = vector.broadcast %23 : f32 to vector<16x128xf32>
    %25 = arith.mulf %22, %24 : vector<16x128xf32>
    %26 = arith.addf %12, %25 : vector<16x128xf32>
    %c0_8 = arith.constant 0 : index
    %c0_9 = arith.constant 0 : index
    %27 = vector.load %arg2[%c0_8, %c0_9] : memref<16x128xf32, #tpu.memory_space<vmem>>, vector<16x128xf32>
    tpu.vector_store %arg2[%c0_8, %c0_9], %26 {strides = array<i32>} : memref<16x128xf32, #tpu.memory_space<vmem>>, vector<16x128xf32>,
    return
  }
}

</mosaic_0001>

<llo_original>
// kernel: berhu_loss.1
$region0: #{berhu_loss.1}
  #allocation0 [shape = 'u32[]', space=smem, size = 0x4, offset = 0x4, fixed_abs, tag = 'smem constant byte address 0x4 - core index']
  #allocation1 [shape = 'u32[144,128]{1,0:T(1,128)}', space=vmem, size = 0x12000, scoped, tag = 'internal scratch']
  %s0 = inlined_call_operand.vmem [shape: f32[16,128], index: 0, kind: input, shape index: {}]
  %s1 = inlined_call_operand.vmem [shape: f32[16,128], index: 1, kind: input, shape index: {}]
  %s2 = inlined_call_operand.vmem [shape: f32[16,128], index: 2, kind: output, shape index: {}]
  %s3 = sld [smem:[#allocation0]]
  $region18: #{berhu_loss.1} parent=0
    _
  %s5 = ssub.s32 1, %s3
  %s6 = scalar_select 0, %s5, %s3
  // Predicated region
  $region2: #{berhu_loss.1} parent=0 // pred_check
    _
  $region3: #{berhu_loss.1} parent=0 // pred_check_branch
    %8 = sbr.rel (0) target = $region5
  $region4: #{berhu_loss.1} parent=0 // pred_region
    _
  $region5: #{berhu_loss.1} parent=0 // pred_fallthru
    _
  // Predicated region
  $region6: #{berhu_loss.1} parent=0 // pred_check
    _
  $region7: #{berhu_loss.1} parent=0 // pred_check_branch
    %10 = sbr.rel (0) target = $region9
  $region8: #{berhu_loss.1} parent=0 // pred_region
    _
  $region9: #{berhu_loss.1} parent=0 // pred_fallthru
    _
  %v11 = vld [vmem:[%s0] sm:$0xff]
  %v12 = vld [vmem:[%s0 + $0x8] sm:$0xff]
  %v13 = vld [vmem:[%s1] sm:$0xff]
  %v14 = vld [vmem:[%s1 + $0x8] sm:$0xff]
  %v15 = vsub.f32 %v11, %v13
  %v16 = vsub.f32 %v12, %v14
  %v17 = vand.u32 2147483647, %v15
  %v18 = vand.u32 2147483647, %v16
  %v19 = vmax.f32 %v17, %v18
  %20 = vmax.xlane.f32.xlu0 %v19
  %v21 = vpop.xlane.xlu0 %20
  %v22 = vrot.slane %v21, 4
  %v23 = vmax.f32 %v21, %v22
  %v24 = vrot.slane %v23, 2
  %v25 = vmax.f32 %v23, %v24
  %v26 = vrot.slane %v25, 1
  %v27 = vmax.f32 %v25, %v26
  %s28 = vtos %v27
  %s29 = smul.f32 %s28, 0.2
  %v30 = vstv %s29
  %vm31 = vcmp.lt.f32.partialorder %v17, %v30
  %vm32 = vcmp.lt.f32.partialorder %v18, %v30
  %v33 = vsel %vm31, %v17, 0.0
  %v34 = vsel %vm32, %v18, 0.0
  %v35 = vmul.f32 %v17, %v17
  %v36 = vmul.f32 %v18, %v18
  %s37 = smul.f32 %s29, %s29
  %v38 = vstv %s37
  %v39 = vadd.f32 %v35, %v38
  %v40 = vadd.f32 %v36, %v38
  %s41 = smul.f32 %s29, 2.0
  %s42 = smul.f32 %s41, %s29
  %v43 = vstv %s42
  %vm44 = vcmp.gt.f32.partialorder %v39, %v43
  %vm45 = vcmp.gt.f32.partialorder %v40, %v43
  %v46 = vsel %vm44, %v39, 0.0
  %v47 = vsel %vm45, %v40, 0.0
  %v48 = vstv %s29
  %v49 = vrcp.pop %v48
  %s50 = vtos %v49
  %s51 = smul.f32 0.5, %s50
  %v52 = vstv %s51
  %v53 = vmul.f32 %v46, %v52
  %v54 = vmul.f32 %v47, %v52
  %v55 = vadd.f32 %v33, %v53
  %v56 = vadd.f32 %v34, %v54
  %57 = vst [vmem:[%s2] sm:$0xff] %v55
  %58 = vst [vmem:[%s2 + $0x8] sm:$0xff] %v56
  // Predicated region
  $region10: #{berhu_loss.1} parent=0 // pred_check
    _
  $region11: #{berhu_loss.1} parent=0 // pred_check_branch
    %60 = sbr.rel (0) target = $region13
  $region12: #{berhu_loss.1} parent=0 // pred_region
    _
  $region13: #{berhu_loss.1} parent=0 // pred_fallthru
    _
  // Predicated region
  $region14: #{berhu_loss.1} parent=0 // pred_check
    _
  $region15: #{berhu_loss.1} parent=0 // pred_check_branch
    %62 = sbr.rel (0) target = $region17
  $region16: #{berhu_loss.1} parent=0 // pred_region
    _
  $region17: #{berhu_loss.1} parent=0 // pred_fallthru
    _

</llo_original>
